<compile_context>
chip_gen: v7x
topology: tpu7x:2x2x1
jax: 0.10.0
libtpu: 0.0.40
codegen_flags: <defaults>
</compile_context>

<pallas_src>
import functools

import jax
import jax.numpy as jnp
from jax.experimental import pallas as pl
from jax.experimental.pallas import tpu as pltpu


_MIB = 1 << 20
# Conservative budgets sized for v7x (64 MiB physical VMEM); v5e/v6e (128 MiB)
# have extra headroom on top of these.
_FUSED_VMEM_BUDGET = 36 * _MIB     # double-buffered x+out blocks (fused path)
_TILE_VMEM_BUDGET = 16 * _MIB      # double-buffered big block (tiled path)
_VMEM_LIMIT_CAP = 56 * _MIB


def _round_down_mult(x, m):
    return max(m, (x // m) * m)


def _vmem_limit(needed_bytes):
    # needed_bytes already counts double-buffering; add margin for compiler
    # internal scratch / temps and clamp below v7x physical VMEM.
    return int(min(max(int(needed_bytes * 1.5) + 4 * _MIB, 32 * _MIB),
                   _VMEM_LIMIT_CAP))


# ---------------------------------------------------------------------------
# Fused single-pass kernel (feature map block fits VMEM): Bn images per step.
# ---------------------------------------------------------------------------
def _gap_conv1x1_fused_kernel(x_ref, wt_ref, scale_ref, bias_ref, o_ref):
    # x_ref:     (Bn, C_in,  HW)  input block (Bn batch elements)
    # wt_ref:    (C_in, C_out)    transposed 1x1 conv weight (f32)
    # scale_ref: (1, C_out)       folded BN scale (includes the 1/HW of GAP)
    # bias_ref:  (1, C_out)       folded BN bias
    # o_ref:     (Bn, C_out, HW)
    # GAP as a sum, accumulated in f32 without materializing an f32 copy.
    gap = jnp.sum(x_ref[...], axis=-1, dtype=jnp.float32)            # (Bn, C_in)
    # 1x1 conv for Bn images at once: a real MXU matmul, f32 accumulation.
    y = jnp.dot(gap, wt_ref[...], preferred_element_type=jnp.float32)  # (Bn, C_out)
    y = jnp.maximum(y * scale_ref[...] + bias_ref[...], 0.0)         # BN + ReLU
    # Cast BEFORE broadcasting: C_out values instead of C_out*HW.
    y = y.astype(o_ref.dtype)
    # Bilinear upsample from 1x1 (align_corners=False) == broadcast over HW.
    o_ref[...] = jnp.broadcast_to(y[:, :, None], o_ref.shape)


# ---------------------------------------------------------------------------
# Large-feature-map path, pass 1: HW-tiled per-image channel sums.
# ---------------------------------------------------------------------------
def _gap_sum_kernel(x_ref, gsum_ref, *, hw_total, hw_tile):
    # x_ref:    (1, C_in, hw_tile)   one HW chunk of one image
    # gsum_ref: (1, 1, C_in)         resident f32 accumulator (same block for
    #                                every HW step of this image)
    k = pl.program_id(1)

    @pl.when(k == 0)
    def _():
        gsum_ref[...] = jnp.zeros_like(gsum_ref)

    x = x_ref[...]
    # Mask the (possibly padded) last HW chunk so OOB lanes do not pollute the
    # reduction.
    pos = jax.lax.broadcasted_iota(jnp.int32, x.shape, 2) + k * hw_tile
    x = jnp.where(pos < hw_total, x, jnp.zeros_like(x))
    gsum_ref[...] += jnp.sum(x, axis=-1, dtype=jnp.float32)[:, None, :]


# ---------------------------------------------------------------------------
# Large-feature-map path, pass 2: conv + BN + ReLU + broadcast, HW-tiled.
# ---------------------------------------------------------------------------
def _broadcast_kernel(gsum_ref, wt_ref, scale_ref, bias_ref, o_ref):
    # gsum_ref: (1, 1, C_in) f32; o_ref: (1, C_out, hw_tile)
    gap = gsum_ref[...][0]                                            # (1, C_in)
    y = jnp.dot(gap, wt_ref[...], preferred_element_type=jnp.float32)  # (1, C_out)
    y = jnp.maximum(y * scale_ref[...] + bias_ref[...], 0.0)
    y = y.astype(o_ref.dtype)                                         # cast first
    o_ref[...] = jnp.broadcast_to(y[:, :, None], o_ref.shape)


def gap_conv1x1(x, conv_weight, gamma, beta, running_mean, running_var,
                eps: float = 1e-5):
    """Forward pass of GAPConv1x1.

    x:           (N, C_in, H, W)
    conv_weight: (C_out, C_in, 1, 1)   (Conv2d weight, bias=False)
    gamma/beta/running_mean/running_var: (C_out,) BatchNorm2d params/stats
    returns:     (N, C_out, H, W), same dtype as x
    """
    N, C_in, H, W = x.shape
    C_out = conv_weight.shape[0]
    HW = H * W

    # Free reshapes (no data movement).
    x3 = x.reshape(N, C_in, HW)
    wt = conv_weight.reshape(C_out, C_in).astype(jnp.float32).T       # (C_in, C_out)

    # Fold BatchNorm (eval mode) into scale/bias, and fold the 1/HW of the GAP
    # into the scale (GAP -> conv -> scale is linear).
    # TODO(synk): training-mode BatchNorm (batch statistics over N) is not
    # computed in-kernel; inference-mode folding with running stats is used.
    inv_std = jax.lax.rsqrt(running_var.astype(jnp.float32) + eps)
    g = gamma.astype(jnp.float32) * inv_std
    scale = (g / float(HW)).reshape(1, C_out)
    bias = (beta.astype(jnp.float32)
            - running_mean.astype(jnp.float32) * g).reshape(1, C_out)

    x_bytes = x.dtype.itemsize
    o_bytes = x_bytes
    per_image = (C_in * x_bytes + C_out * o_bytes) * HW               # HBM bytes/image
    small = C_in * C_out * 4 + 2 * C_out * 4                          # weights + BN

    if 2 * per_image + 2 * small <= _FUSED_VMEM_BUDGET:
        # ------------------- fused single-pass path -------------------------
        bn_max = max(1, _FUSED_VMEM_BUDGET // (2 * per_image))
        bn = 1
        for cand in range(int(min(N, bn_max)), 0, -1):
            if N % cand == 0:                 # divisor -> no ragged last block
                bn = cand
                break
        grid = (N // bn,)
        needed = 2 * bn * per_image + 2 * small + bn * C_out * HW * 4
        out3 = pl.pallas_call(
            _gap_conv1x1_fused_kernel,
            out_shape=jax.ShapeDtypeStruct((N, C_out, HW), x.dtype),
            grid_spec=pltpu.PrefetchScalarGridSpec(
                num_scalar_prefetch=0,
                grid=grid,
                in_specs=[
                    pl.BlockSpec((bn, C_in, HW), lambda n: (n, 0, 0)),
                    pl.BlockSpec((C_in, C_out), lambda n: (0, 0)),
                    pl.BlockSpec((1, C_out), lambda n: (0, 0)),
                    pl.BlockSpec((1, C_out), lambda n: (0, 0)),
                ],
                out_specs=pl.BlockSpec((bn, C_out, HW), lambda n: (n, 0, 0)),
            ),
            compiler_params=pltpu.CompilerParams(
                dimension_semantics=("parallel",),
                vmem_limit_bytes=_vmem_limit(needed),
            ),
        )(x3, wt, scale, bias)
        return out3.reshape(N, C_out, H, W)

    # ------------------- large-feature-map two-pass path --------------------
    # Bounds VMEM to a few MiB regardless of H*W (needed on v7x's 64 MiB VMEM)
    # with zero extra large-array HBM traffic (only a tiny (N,1,C_in) f32
    # intermediate).
    # Pass 1: HW-tiled GAP sums per image.
    tile1 = _TILE_VMEM_BUDGET // (2 * C_in * x_bytes)
    tile1 = HW if HW <= tile1 else _round_down_mult(tile1, 128)
    nk1 = pl.cdiv(HW, tile1)
    gsum = pl.pallas_call(
        functools.partial(_gap_sum_kernel, hw_total=HW, hw_tile=tile1),
        out_shape=jax.ShapeDtypeStruct((N, 1, C_in), jnp.float32),
        grid_spec=pltpu.PrefetchScalarGridSpec(
            num_scalar_prefetch=0,
            grid=(N, nk1),
            in_specs=[pl.BlockSpec((1, C_in, tile1), lambda n, k: (n, 0, k))],
            out_specs=pl.BlockSpec((1, 1, C_in), lambda n, k: (n, 0, 0)),
        ),
        compiler_params=pltpu.CompilerParams(
            dimension_semantics=("parallel", "arbitrary"),
            vmem_limit_bytes=_vmem_limit(2 * C_in * tile1 * x_bytes),
        ),
    )(x3)

    # Pass 2: conv + BN + ReLU + broadcast, tiled over HW.  Both grid axes are
    # parallel, so the dominant HBM write is split across TensorCores even for
    # N == 1 (v7x megacore).
    tile2 = _TILE_VMEM_BUDGET // (2 * C_out * o_bytes)
    tile2 = HW if HW <= tile2 else _round_down_mult(tile2, 128)
    nk2 = pl.cdiv(HW, tile2)
    out3 = pl.pallas_call(
        _broadcast_kernel,
        out_shape=jax.ShapeDtypeStruct((N, C_out, HW), x.dtype),
        grid_spec=pltpu.PrefetchScalarGridSpec(
            num_scalar_prefetch=0,
            grid=(N, nk2),
            in_specs=[
                pl.BlockSpec((1, 1, C_in), lambda n, k: (n, 0, 0)),
                pl.BlockSpec((C_in, C_out), lambda n, k: (0, 0)),
                pl.BlockSpec((1, C_out), lambda n, k: (0, 0)),
                pl.BlockSpec((1, C_out), lambda n, k: (0, 0)),
            ],
            out_specs=pl.BlockSpec((1, C_out, tile2), lambda n, k: (n, 0, k)),
        ),
        compiler_params=pltpu.CompilerParams(
            dimension_semantics=("parallel", "parallel"),
            vmem_limit_bytes=_vmem_limit(2 * C_out * tile2 * o_bytes),
        ),
    )(gsum, wt, scale, bias)
    return out3.reshape(N, C_out, H, W)


def _reference(x, conv_weight, gamma, beta, running_mean, running_var,
               eps: float = 1e-5):
    """Pure-JAX reference matching the PyTorch module (BN in eval mode)."""
    N, C_in, H, W = x.shape
    C_out = conv_weight.shape[0]
    gap = jnp.mean(x.astype(jnp.float32), axis=(2, 3), keepdims=True)
    w2 = conv_weight.reshape(C_out, C_in).astype(jnp.float32)
    y = jnp.einsum("ncij,oc->noij", gap, w2)
    inv_std = jax.lax.rsqrt(running_var.astype(jnp.float32) + eps)
    y = (y - running_mean.reshape(1, -1, 1, 1)) * inv_std.reshape(1, -1, 1, 1)
    y = y * gamma.reshape(1, -1, 1, 1) + beta.reshape(1, -1, 1, 1)
    y = jnp.maximum(y, 0.0)
    # bilinear interpolate from 1x1 (align_corners=False) == broadcast
    return jnp.broadcast_to(y, (N, C_out, H, W)).astype(x.dtype)


if __name__ == "__main__":
    key = jax.random.PRNGKey(0)
    k_x, k_w, k_g, k_b, k_m, k_v = jax.random.split(key, 6)

    N, C_in, C_out, H, W = 2, 4, 8, 16, 16

    x = jax.random.normal(k_x, (N, C_in, H, W), dtype=jnp.float32)
    conv_weight = jax.random.normal(k_w, (C_out, C_in, 1, 1),
                                    dtype=jnp.float32) * 0.5
    gamma = jax.random.normal(k_g, (C_out,), dtype=jnp.float32) * 0.1 + 1.0
    beta = jax.random.normal(k_b, (C_out,), dtype=jnp.float32) * 0.1
    running_mean = jax.random.normal(k_m, (C_out,), dtype=jnp.float32) * 0.1
    running_var = jnp.abs(jax.random.normal(k_v, (C_out,),
                                            dtype=jnp.float32)) * 0.2 + 0.8

    y = gap_conv1x1(x, conv_weight, gamma, beta, running_mean, running_var)
    jax.block_until_ready(y)

    y_ref = _reference(x, conv_weight, gamma, beta, running_mean, running_var)

    assert y.shape == (N, C_out, H, W), y.shape
    assert y.dtype == x.dtype, (y.dtype, x.dtype)
    assert bool(jnp.allclose(y, y_ref, rtol=1e-5, atol=1e-5)), \
        "GAPConv1x1 output mismatch vs reference"

    print("KERNEL_OK")
</pallas_src>

<mosaic_0001>
module attributes {stable_mosaic.version = 11 : i64} {
  func.func @_gap_conv1x1_fused_kernel(%arg0: i32, %arg1: memref<2x4x256xf32, #tpu.memory_space<vmem>>, %arg2: memref<4x8xf32, #tpu.memory_space<vmem>>, %arg3: memref<1x8xf32, #tpu.memory_space<vmem>>, %arg4: memref<1x8xf32, #tpu.memory_space<vmem>>, %arg5: memref<2x8x256xf32, #tpu.memory_space<vmem>>) attributes {dimension_semantics = [#tpu.dimension_semantics<parallel>], iteration_bounds = array<i64: 1>, scalar_prefetch = 0 : i64, scratch_operands = 0 : i64, tpu.core_type = #tpu.core_type<tc>, window_params = [{transform_indices = @transform_0, window_bounds = array<i64: 2, 4, 256>}, {pipeline_mode = #tpu.pipeline_mode<synchronous>, transform_indices = @transform_1, window_bounds = array<i64: 4, 8>}, {pipeline_mode = #tpu.pipeline_mode<synchronous>, transform_indices = @transform_2, window_bounds = array<i64: 1, 8>}, {pipeline_mode = #tpu.pipeline_mode<synchronous>, transform_indices = @transform_3, window_bounds = array<i64: 1, 8>}, {transform_indices = @transform_4, window_bounds = array<i64: 2, 8, 256>}]} {
    %c0 = arith.constant 0 : index
    %c0_0 = arith.constant 0 : index
    %c0_1 = arith.constant 0 : index
    %0 = vector.load %arg1[%c0, %c0_0, %c0_1] : memref<2x4x256xf32, #tpu.memory_space<vmem>>, vector<2x4x256xf32>
    %cst = arith.constant dense<0.000000e+00> : vector<2x4xf32>
    %1 = vector.multi_reduction <add>, %0, %cst [2] : vector<2x4x256xf32> to vector<2x4xf32>
    %c0_2 = arith.constant 0 : index
    %c0_3 = arith.constant 0 : index
    %2 = vector.load %arg2[%c0_2, %c0_3] : memref<4x8xf32, #tpu.memory_space<vmem>>, vector<4x8xf32>
    %cst_4 = arith.constant dense<0.000000e+00> : vector<2x8xf32>
    %3 = tpu.matmul %1, %2, %cst_4 {dimension_numbers = #tpu.dot_dimension_numbers<[1], [0], [0], [1], [0, 0, 1, 1], [], []>} : vector<2x4xf32>, vector<4x8xf32>, vector<2x8xf32> -> vector<2x8xf32>
    %c0_5 = arith.constant 0 : index
    %c0_6 = arith.constant 0 : index
    %4 = vector.load %arg3[%c0_5, %c0_6] : memref<1x8xf32, #tpu.memory_space<vmem>>, vector<1x8xf32>
    %5 = vector.broadcast %4 : vector<1x8xf32> to vector<2x8xf32>
    %6 = arith.mulf %3, %5 : vector<2x8xf32>
    %c0_7 = arith.constant 0 : index
    %c0_8 = arith.constant 0 : index
    %7 = vector.load %arg4[%c0_7, %c0_8] : memref<1x8xf32, #tpu.memory_space<vmem>>, vector<1x8xf32>
    %8 = vector.broadcast %7 : vector<1x8xf32> to vector<2x8xf32>
    %9 = arith.addf %6, %8 : vector<2x8xf32>
    %cst_9 = arith.constant 0.000000e+00 : f32
    %10 = vector.broadcast %cst_9 : f32 to vector<2x8xf32>
    %11 = arith.maximumf %9, %10 : vector<2x8xf32>
    %12 = vector.shape_cast %11 : vector<2x8xf32> to vector<2x8x1xf32>
    %13 = vector.shape_cast %12 : vector<2x8x1xf32> to vector<2x8x1xf32>
    %14 = vector.broadcast %13 : vector<2x8x1xf32> to vector<2x8x256xf32>
    %c0_10 = arith.constant 0 : index
    %c0_11 = arith.constant 0 : index
    %c0_12 = arith.constant 0 : index
    %15 = vector.load %arg5[%c0_10, %c0_11, %c0_12] : memref<2x8x256xf32, #tpu.memory_space<vmem>>, vector<2x8x256xf32>
    tpu.vector_store %arg5[%c0_10, %c0_11, %c0_12], %14 {strides = array<i32>} : memref<2x8x256xf32, #tpu.memory_space<vmem>>, vector<2x8x256xf32>,
    return
  }
  func.func @transform_0(%arg0: i32) -> (i32, i32, i32) {
    %c0_i32 = arith.constant 0 : i32
    %c0_i32_0 = arith.constant 0 : i32
    %c0_i32_1 = arith.constant 0 : i32
    return %arg0, %c0_i32, %c0_i32_0 : i32, i32, i32
  }
  func.func @transform_1(%arg0: i32) -> (i32, i32) {
    %c0_i32 = arith.constant 0 : i32
    %c0_i32_0 = arith.constant 0 : i32
    %c0_i32_1 = arith.constant 0 : i32
    return %c0_i32, %c0_i32_0 : i32, i32
  }
  func.func @transform_2(%arg0: i32) -> (i32, i32) {
    %c0_i32 = arith.constant 0 : i32
    %c0_i32_0 = arith.constant 0 : i32
    %c0_i32_1 = arith.constant 0 : i32
    return %c0_i32, %c0_i32_0 : i32, i32
  }
  func.func @transform_3(%arg0: i32) -> (i32, i32) {
    %c0_i32 = arith.constant 0 : i32
    %c0_i32_0 = arith.constant 0 : i32
    %c0_i32_1 = arith.constant 0 : i32
    return %c0_i32, %c0_i32_0 : i32, i32
  }
  func.func @transform_4(%arg0: i32) -> (i32, i32, i32) {
    %c0_i32 = arith.constant 0 : i32
    %c0_i32_0 = arith.constant 0 : i32
    %c0_i32_1 = arith.constant 0 : i32
    return %arg0, %c0_i32, %c0_i32_0 : i32, i32, i32
  }
}

</mosaic_0001>

<llo_original>
// kernel: tpu_custom_call.1
$region0: #{tpu_custom_call.1}
  #allocation0 [shape = 'u32[]', space=smem, size = 0x4, offset = 0x4, fixed_abs, tag = 'smem constant byte address 0x4 - core index']
  #allocation1 [shape = 'u32[144,128]{1,0:T(1,128)}', space=vmem, size = 0x12000, scoped, tag = 'internal scratch']
  %s0 = inlined_call_operand.hbm [shape: f32[2,4,256], index: 0, kind: input, shape index: {}]
  %s1 = inlined_call_operand.hbm [shape: f32[4,8], index: 1, kind: input, shape index: {}]
  %s2 = inlined_call_operand.vmem [shape: f32[1,8], index: 2, kind: input, shape index: {}]
  %s3 = inlined_call_operand.vmem [shape: f32[1,8], index: 3, kind: input, shape index: {}]
  %s4 = inlined_call_operand.hbm [shape: f32[2,8,256], index: 4, kind: output, shape index: {}]
  %s5 = sld [smem:[#allocation0]]
  $region34: #{tpu_custom_call.1} parent=0
    _
  %s7 = ssub.s32 1, %s5
  %s8 = scalar_select 0, %s7, %s5
  $region1: #{tpu_custom_call.1} parent=0
    #allocation2 [shape = 'u8[8192]{0}', space=vmem, size = 0x2000, scoped, tag = 'input window, operand 0, single buffered']
    #allocation3 [shape = 's32[1]{0}', space=sflag, size = 0x4, scoped, tag = 'scoped memory for tpu_custom_call.1']
    #allocation4 [shape = 's32[1]{0}', space=sflag, size = 0x4, scoped, tag = 'scoped memory for tpu_custom_call.1']
    #allocation5 [shape = 'u8[2048]{0}', space=vmem, size = 0x800, scoped, tag = 'input window, operand 1, single buffered']
    #allocation6 [shape = 's32[1]{0}', space=sflag, size = 0x4, scoped, tag = 'scoped memory for tpu_custom_call.1']
    #allocation7 [shape = 'u8[16384]{0}', space=vmem, size = 0x4000, scoped, tag = 'output window, operand 0, single buffered']
    %9 = vsyncpa [#allocation3], 0
    %10 = vsyncpa [#allocation6], 0
    %11 = vsyncpa [#allocation4], 0
    // Predicated region
    $region2: #{tpu_custom_call.1} parent=1 // pred_check
      _
    $region3: #{tpu_custom_call.1} parent=1 // pred_check_branch
      %13 = sbr.rel (0) target = $region5
    $region4: #{tpu_custom_call.1} parent=1 // pred_region
      %s15 = ssub.s32 256, 256
      %16 = vsyncadd [#allocation3], %s15
      %s17 = sshll.u32 [#allocation2], 4
      %s18 = int_to_ptr.vmem [resolvable:$true] %s17
      %23 = dma.hbm_to_vmem [thread:$0]  %s0, 256, %s18, [#allocation3], 128, 128, 8
    $region5: #{tpu_custom_call.1} parent=1 // pred_fallthru
      _
    // Predicated region
    $region6: #{tpu_custom_call.1} parent=1 // pred_check
      _
    $region7: #{tpu_custom_call.1} parent=1 // pred_check_branch
      %25 = sbr.rel (0) target = $region9
    $region8: #{tpu_custom_call.1} parent=1 // pred_region
      %s27 = ssub.s32 64, 64
      %28 = vsyncadd [#allocation6], %s27
      %s30 = sshll.u32 [#allocation5], 4
      %s31 = int_to_ptr.vmem [resolvable:$true] %s30
      %33 = dma.hbm_to_vmem [thread:$0]  %s1, 64, %s31, [#allocation6]
    $region9: #{tpu_custom_call.1} parent=1 // pred_fallthru
      _
    // Predicated region
    $region10: #{tpu_custom_call.1} parent=1 // pred_check
      _
    $region11: #{tpu_custom_call.1} parent=1 // pred_check_branch
      %35 = sbr.rel (0) target = $region13
    $region12: #{tpu_custom_call.1} parent=1 // pred_region
      _
    $region13: #{tpu_custom_call.1} parent=1 // pred_fallthru
      _
    // Predicated region
    $region14: #{tpu_custom_call.1} parent=1 // pred_check
      _
    $region15: #{tpu_custom_call.1} parent=1 // pred_check_branch
      %37 = sbr.rel (0) target = $region17
    $region16: #{tpu_custom_call.1} parent=1 // pred_region
      _
    $region17: #{tpu_custom_call.1} parent=1 // pred_fallthru
      _
    // Predicated region
    $region18: #{tpu_custom_call.1} parent=1 // pred_check
      _
    $region19: #{tpu_custom_call.1} parent=1 // pred_check_branch
      %39 = sbr.rel (0) target = $region21
    $region20: #{tpu_custom_call.1} parent=1 // pred_region
      %40 = dma.done [#allocation3], 256
    $region21: #{tpu_custom_call.1} parent=1 // pred_fallthru
      _
    // Predicated region
    $region22: #{tpu_custom_call.1} parent=1 // pred_check
      _
    $region23: #{tpu_custom_call.1} parent=1 // pred_check_branch
      %42 = sbr.rel (0) target = $region25
    $region24: #{tpu_custom_call.1} parent=1 // pred_region
      %43 = dma.done [#allocation6], 64
    $region25: #{tpu_custom_call.1} parent=1 // pred_fallthru
      _
    %v44 = vld [vmem:[#allocation2] sm:$0xff]
    %v45 = vld [vmem:[#allocation2 + $0x8] sm:$0xff]
    %v48 = vcombine.high %v44, %v44
    %v49 = vcombine.high %v45, %v45
    %vm52 = vcmask 1043456
    %v53 = vsel %vm52, %v44, 0.0
    %v54 = vsel %vm52, %v48, 0.0
    %v55 = vadd.f32 %v53, %v54
    %56 = vadd.xlane.f32.xlu0 %v55
    %v57 = vpop.xlane.xlu0 %56
    %v58 = vsel %vm52, %v45, 0.0
    %v59 = vsel %vm52, %v49, 0.0
    %v60 = vadd.f32 %v58, %v59
    %61 = vadd.xlane.f32.xlu0 %v60
    %v62 = vpop.xlane.xlu0 %61
    %v63 = vld [vmem:[#allocation5] sm:$0xf]
    %v66 = vlaneseq
    %v67 = vand.u32 %v66, 127
    %v68 = vlaneseq
    %v69 = vshrl.u32 %v68, 7
    %v70 = vsub.s32 %v67, %v69
    %v71 = vrot.slane %v57, %v70
    %v72 = vlaneseq
    %v73 = vshrl.u32 %v72, 7
    %v74 = vsub.s32 %v67, %v73
    %v75 = vrot.slane %v62, %v74
    %vm76 = vcmask 1041409
    %v77 = vsel %vm76, %v75, %v71
    %vm78 = vcmask 31744
    %v79 = vsel %vm78, %v77, 0
    %v82 = vsel %vm52, %v63, 0
    %84 = vmatprep.subr.mxu0 0.0
    %85 = vmatpush1.msra.mxu0 %v82
    %86 = vmatprep.subr.mxu0 0.0
    %87 = vmatpush1.msra.mxu0 0.0
    %88 = vmatprep.subr.mxu0 0.0
    %89 = vmatpush1.msra.mxu0 0.0
    %90 = vmatprep.subr.mxu0 0.0
    %91 = vmatpush1.msra.mxu0 0.0
    %92 = vmatprep.subr.mxu0 0.0
    %93 = vmatpush1.msra.mxu0 0.0
    %94 = vmatprep.subr.mxu0 0.0
    %95 = vmatpush1.msra.mxu0 0.0
    %96 = vmatprep.subr.mxu0 0.0
    %97 = vmatpush1.msra.mxu0 0.0
    %98 = vmatprep.subr.mxu0 0.0
    %99 = vmatpush1.msra.mxu0 0.0
    %100 = vmatprep.subr.mxu0 0.0
    %101 = vmatpush1.msra.mxu0 0.0
    %102 = vmatprep.subr.mxu0 0.0
    %103 = vmatpush1.msra.mxu0 0.0
    %104 = vmatprep.subr.mxu0 0.0
    %105 = vmatpush1.msra.mxu0 0.0
    %106 = vmatprep.subr.mxu0 0.0
    %107 = vmatpush1.msra.mxu0 0.0
    %108 = vmatprep.subr.mxu0 0.0
    %109 = vmatpush1.msra.mxu0 0.0
    %110 = vmatprep.subr.mxu0 0.0
    %111 = vmatpush1.msra.mxu0 0.0
    %112 = vmatprep.subr.mxu0 0.0
    %113 = vmatpush1.msra.mxu0 0.0
    %114 = vmatprep.subr.mxu0 0.0
    %115 = vmatpush1.msra.mxu0 0.0
    %116 = vmatprep.subr.mxu0 0.0
    %117 = vmatpush1.msra.mxu0 0.0
    %118 = vmatprep.subr.mxu0 0.0
    %119 = vmatpush1.msra.mxu0 0.0
    %120 = vmatprep.subr.mxu0 0.0
    %121 = vmatpush1.msra.mxu0 0.0
    %122 = vmatprep.subr.mxu0 0.0
    %123 = vmatpush1.msra.mxu0 0.0
    %124 = vmatprep.subr.mxu0 0.0
    %125 = vmatpush1.msra.mxu0 0.0
    %126 = vmatprep.subr.mxu0 0.0
    %127 = vmatpush1.msra.mxu0 0.0
    %128 = vmatprep.subr.mxu0 0.0
    %129 = vmatpush1.msra.mxu0 0.0
    %130 = vmatprep.subr.mxu0 0.0
    %131 = vmatpush1.msra.mxu0 0.0
    %132 = vmatprep.subr.mxu0 0.0
    %133 = vmatpush1.msra.mxu0 0.0
    %134 = vmatprep.subr.mxu0 0.0
    %135 = vmatpush1.msra.mxu0 0.0
    %136 = vmatprep.subr.mxu0 0.0
    %137 = vmatpush1.msra.mxu0 0.0
    %138 = vmatprep.subr.mxu0 0.0
    %139 = vmatpush1.msra.mxu0 0.0
    %140 = vmatprep.subr.mxu0 0.0
    %141 = vmatpush1.msra.mxu0 0.0
    %142 = vmatprep.subr.mxu0 0.0
    %143 = vmatpush1.msra.mxu0 0.0
    %144 = vmatprep.subr.mxu0 0.0
    %145 = vmatpush1.msra.mxu0 0.0
    %146 = vmatprep.subr.mxu0 0.0
    %147 = vmatpush1.msra.mxu0 0.0
    %148 = vmatprep.mubr.f32.mxu0 0.0
    %149 = vmatmul.mubr.f32.gmra.mrb[0].mxu0 %v79
    %v150 = vpop.f32.mrb[0].mxu0
    %v151 = vadd.f32 0.0, %v150
    %v152 = vpop.f32.mrb[0].mxu0
    %153 = vdwg.mxu0
    %v154 = vld [vmem:[%s2] sm:$0x1]
    %v156 = vlaneseq
    %v157 = vshrl.u32 %v156, 7
    %v158 = vsub.s32 0, %v157
    %v159 = vrot.slane %v154, %v158
    %v161 = vmul.f32 %v151, %v159
    %v162 = vld [vmem:[%s3] sm:$0x1]
    %v164 = vlaneseq
    %v165 = vshrl.u32 %v164, 7
    %v166 = vsub.s32 0, %v165
    %v167 = vrot.slane %v162, %v166
    %v169 = vadd.f32 %v161, %v167
    %v170 = vmax.f32 %v169, 0.0
    %v171 = vlaneseq
    %v172 = vshrl.u32 %v171, 7
    %v173 = vsub.s32 0, %v172
    %v174 = vrot.slane %v170, %v173
    %176 = vbcast.lane.b32.xlu0 %v174, 256
    %v177 = vpop.permute.xlu0 %176
    %v178 = vlaneseq
    %v179 = vshrl.u32 %v178, 7
    %v180 = vsub.s32 1, %v179
    %v181 = vrot.slane %v170, %v180
    %183 = vbcast.lane.b32.xlu0 %v181, 256
    %v184 = vpop.permute.xlu0 %183
    %185 = vst [vmem:[#allocation7] sm:$0xff] %v177
    %186 = vst [vmem:[#allocation7 + $0x8] sm:$0xff] %v177
    %187 = vst [vmem:[#allocation7 + $0x10] sm:$0xff] %v184
    %188 = vst [vmem:[#allocation7 + $0x18] sm:$0xff] %v184
    // Predicated region
    $region26: #{tpu_custom_call.1} parent=1 // pred_check
      _
    $region27: #{tpu_custom_call.1} parent=1 // pred_check_branch
      %190 = sbr.rel (0) target = $region29
    $region28: #{tpu_custom_call.1} parent=1 // pred_region
      %s192 = ssub.s32 512, 512
      %193 = vsyncadd [#allocation4], %s192
      %s194 = sshll.u32 [#allocation7], 4
      %s195 = int_to_ptr.vmem [resolvable:$true] %s194
      %200 = dma.vmem_to_hbm [thread:$0]  %s195, 512, %s4, [#allocation4], 256, 256, 16
    $region29: #{tpu_custom_call.1} parent=1 // pred_fallthru
      _
    // Predicated region
    $region30: #{tpu_custom_call.1} parent=1 // pred_check
      _
    $region31: #{tpu_custom_call.1} parent=1 // pred_check_branch
      %202 = sbr.rel (0) target = $region33
    $region32: #{tpu_custom_call.1} parent=1 // pred_region
      %203 = dma.done [#allocation4], 512
    $region33: #{tpu_custom_call.1} parent=1 // pred_fallthru
      _
    %204 = vsyncpa [#allocation3], 1
    %205 = vsyncpa [#allocation6], 1
    %206 = vsyncpa [#allocation4], 1

</llo_original>
